<compile_context>
chip_gen: v7x
topology: tpu7x:2x2x1
jax: 0.10.0
libtpu: 0.0.40
codegen_flags: <defaults>
</compile_context>

<pallas_src>
import functools

import jax
import jax.numpy as jnp
from jax.experimental import pallas as pl
from jax.experimental.pallas import tpu as pltpu


def _reflect_tap_sum(x, axis, size, pad, idx):
    """sum_{d=-pad..pad} x[..., reflect(i+d), ...] along `axis`, fully in registers.

    Interior taps use jnp.roll (static shift -> lane/sublane shifts, XLU slot); the
    wrapped border positions (exactly the lanes/rows that need reflection) are
    overwritten from the reflected source slice via jnp.where + iota masks.
    """
    def take(i):
        sl = [slice(None)] * x.ndim
        sl[axis] = slice(i, i + 1)
        return x[tuple(sl)]

    acc = x
    for d in range(1, pad + 1):
        # tap at i+d: wraps at the far edge -> reflect(i+d) = 2*(size-1)-(i+d)
        t = jnp.roll(x, -d, axis=axis)
        for r in range(d):
            t = jnp.where(idx == (size - 1 - r), take(size - 1 + r - d), t)
        acc = acc + t
        # tap at i-d: wraps at the near edge -> reflect(i-d) = d-i
        t = jnp.roll(x, d, axis=axis)
        for r in range(d):
            t = jnp.where(idx == r, take(d - r), t)
        acc = acc + t
    return acc


def _laplacian_var_kernel(x_ref, out_ref, *, H, W, K, denormalize):
    """One grid step: PP planes -> reflect 5x5 Laplacian -> partial (sum, sumsq)."""
    pad = (K - 1) // 2
    norm = 1.0 / (2.0 * (K * K - 1))  # kornia normalize_kernel2d: / sum(|kernel|)

    x = x_ref[...].astype(jnp.float32)            # (PP, H, W), upcast in-kernel
    if denormalize:
        x = (x + 1.0) * 0.5

    w_idx = jax.lax.broadcasted_iota(jnp.int32, (1, 1, W), 2)
    h_idx = jax.lax.broadcasted_iota(jnp.int32, (1, H, 1), 1)

    # separable KxK box sum with reflect borders, no scratch / no padded width
    acc_w = _reflect_tap_sum(x, axis=2, size=W, pad=pad, idx=w_idx)      # lane pass
    box = _reflect_tap_sum(acc_w, axis=1, size=H, pad=pad, idx=h_idx)    # sublane pass

    lap = (box - float(K * K) * x) * norm

    s = jnp.sum(lap)
    q = jnp.sum(lap * lap)
    lane = jax.lax.broadcasted_iota(jnp.int32, (1, 1, 2), 2)
    out_ref[...] = jnp.where(lane == 0, s, q)     # single (1,1,2) partial per step


def _vmem_physical_bytes():
    """Per-TensorCore VMEM capacity; conservative 64 MiB (v7x) fallback."""
    try:
        info = pltpu.get_tpu_info()
        v = int(getattr(info, "vmem_capacity_bytes", 0) or 0)
        if v > 0:
            return min(max(v, 64 * 1024 * 1024), 256 * 1024 * 1024)
    except Exception:
        pass
    return 64 * 1024 * 1024


def laplacian_var(img1, kernel_size=5, denormalize_input=True):
    """LaplacianVar.forward equivalent. img1: (B, C, H, W) (or tuple -> first element)."""
    if isinstance(img1, tuple):
        img1 = img1[0]
    assert kernel_size % 2 == 1 and kernel_size >= 3
    K = kernel_size
    pad = (K - 1) // 2
    B, C, H, W = img1.shape
    assert H >= pad + 1 and W >= pad + 1, "image too small for reflect padding"

    P = B * C
    x = img1.reshape(P, H, W)  # layout-only reshape; keep native dtype on the DMA path

    # Lane density: last dim maps to the 128 lanes. The box filter and the variance are
    # symmetric in H/W, so transpose if that makes the lane axis denser.
    if W < 128 and H > W:
        x = jnp.swapaxes(x, 1, 2)
        H, W = W, H

    # ---- planes per grid step: largest divisor of P that fits the generation-gated
    #      VMEM budget, keeping G >= 2 (and preferably even) for v7x's two TensorCores.
    phys = _vmem_physical_bytes()
    vmem_limit = int(phys * 0.75)            # scoped VMEM limit handed to the compiler
    budget = int(phys * 0.55)                # what we let the per-step footprint use
    in_bytes = jnp.dtype(x.dtype).itemsize
    per_plane = H * W * (2 * in_bytes + 6 * 4)   # dbl-buffered input + ~6 live f32 temps
    mem_cap = max(1, budget // per_plane)

    divs = [d for d in range(1, P + 1) if P % d == 0 and d <= mem_cap]
    if P >= 2:
        two_step = [d for d in divs if P // d >= 2]
        if two_step:
            divs = two_step
    even_g = [d for d in divs if (P // d) % 2 == 0]
    PP = max(even_g) if even_g else max(divs)
    G = P // PP

    kernel = functools.partial(_laplacian_var_kernel, H=H, W=W, K=K,
                               denormalize=denormalize_input)

    partials = pl.pallas_call(
        kernel,
        out_shape=jax.ShapeDtypeStruct((G, 1, 2), jnp.float32),
        grid=(G,),
        in_specs=[pl.BlockSpec((PP, H, W), lambda i: (i, 0, 0))],
        out_specs=pl.BlockSpec((1, 1, 2), lambda i: (i, 0, 0)),
        compiler_params=pltpu.CompilerParams(
            dimension_semantics=("parallel",),
            vmem_limit_bytes=vmem_limit),
    )(x)

    n = float(P * H * W)
    s = jnp.sum(partials[:, 0, 0])
    q = jnp.sum(partials[:, 0, 1])
    # unbiased variance (torch.var default, correction=1)
    return (q - s * s / n) / (n - 1.0)


def _laplacian_var_ref(img1, kernel_size=5, denormalize_input=True):
    """Pure-JAX f32 reference (explicit pad + slice sums)."""
    K = kernel_size
    pad = (K - 1) // 2
    x = img1.astype(jnp.float32)
    if denormalize_input:
        x = (x + 1.0) * 0.5
    B, C, H, W = x.shape
    xp = jnp.pad(x, ((0, 0), (0, 0), (pad, pad), (pad, pad)), mode="reflect")
    box = jnp.zeros_like(x)
    for dy in range(K):
        for dx in range(K):
            box = box + xp[:, :, dy:dy + H, dx:dx + W]
    lap = (box - float(K * K) * x) / (2.0 * (K * K - 1))
    return jnp.var(lap, ddof=1)


if __name__ == "__main__":
    key = jax.random.PRNGKey(0)
    B, C, H, W = 2, 3, 16, 16
    img = jax.random.uniform(key, (B, C, H, W), dtype=jnp.float32,
                             minval=-1.0, maxval=1.0)

    out = jax.block_until_ready(laplacian_var(img))
    ref = jax.block_until_ready(_laplacian_var_ref(img))
    assert jnp.isfinite(out), f"non-finite output: {out}"
    assert jnp.allclose(out, ref, rtol=1e-4, atol=1e-6), f"mismatch: {out} vs {ref}"
    print("KERNEL_OK")
</pallas_src>

<mosaic_0001>
module attributes {stable_mosaic.version = 11 : i64} {
  func.func @_laplacian_var_kernel(%arg0: i32, %arg1: memref<3x16x16xf32, #tpu.memory_space<vmem>>, %arg2: memref<1x1x2xf32, #tpu.memory_space<vmem>>) attributes {dimension_semantics = [#tpu.dimension_semantics<parallel>], iteration_bounds = array<i64: 2>, scalar_prefetch = 0 : i64, scratch_operands = 0 : i64, tpu.core_type = #tpu.core_type<tc>, window_params = [{transform_indices = @transform_0, window_bounds = array<i64: 3, 16, 16>}, {transform_indices = @transform_1, window_bounds = array<i64: 1, 1, 2>}]} {
    %c0 = arith.constant 0 : index
    %c0_0 = arith.constant 0 : index
    %c0_1 = arith.constant 0 : index
    %0 = vector.load %arg1[%c0, %c0_0, %c0_1] : memref<3x16x16xf32, #tpu.memory_space<vmem>>, vector<3x16x16xf32>
    %cst = arith.constant 1.000000e+00 : f32
    %1 = vector.broadcast %cst : f32 to vector<3x16x16xf32>
    %2 = arith.addf %0, %1 : vector<3x16x16xf32>
    %cst_2 = arith.constant 5.000000e-01 : f32
    %3 = vector.broadcast %cst_2 : f32 to vector<3x16x16xf32>
    %4 = arith.mulf %2, %3 : vector<3x16x16xf32>
    %5 = tpu.iota {dimensions = array<i32: 2>} : vector<1x1x16xi32>
    %6 = tpu.iota {dimensions = array<i32: 1>} : vector<1x16x1xi32>
    %7 = vector.extract_strided_slice %4 {offsets = [0, 0, 1], sizes = [3, 16, 15], strides = [1, 1, 1]} : vector<3x16x16xf32> to vector<3x16x15xf32>
    %8 = vector.extract_strided_slice %4 {offsets = [0, 0, 0], sizes = [3, 16, 1], strides = [1, 1, 1]} : vector<3x16x16xf32> to vector<3x16x1xf32>
    %9 = tpu.concatenate %7, %8 in 2 : vector<3x16x15xf32>, vector<3x16x1xf32> -> vector<3x16x16xf32>
    %c15_i32 = arith.constant 15 : i32
    %10 = vector.broadcast %c15_i32 : i32 to vector<1x1x16xi32>
    %11 = arith.cmpi eq, %5, %10 : vector<1x1x16xi32>
    %12 = vector.extract_strided_slice %4 {offsets = [0, 0, 14], sizes = [3, 16, 1], strides = [1, 1, 1]} : vector<3x16x16xf32> to vector<3x16x1xf32>
    %13 = vector.shape_cast %11 : vector<1x1x16xi1> to vector<1x1x16xi1>
    %14 = vector.broadcast %13 : vector<1x1x16xi1> to vector<3x16x16xi1>
    %15 = vector.shape_cast %12 : vector<3x16x1xf32> to vector<3x16x1xf32>
    %16 = vector.broadcast %15 : vector<3x16x1xf32> to vector<3x16x16xf32>
    %17 = arith.select %14, %16, %9 : vector<3x16x16xi1>, vector<3x16x16xf32>
    %18 = arith.addf %4, %17 : vector<3x16x16xf32>
    %19 = vector.extract_strided_slice %4 {offsets = [0, 0, 15], sizes = [3, 16, 1], strides = [1, 1, 1]} : vector<3x16x16xf32> to vector<3x16x1xf32>
    %20 = vector.extract_strided_slice %4 {offsets = [0, 0, 0], sizes = [3, 16, 15], strides = [1, 1, 1]} : vector<3x16x16xf32> to vector<3x16x15xf32>
    %21 = tpu.concatenate %19, %20 in 2 : vector<3x16x1xf32>, vector<3x16x15xf32> -> vector<3x16x16xf32>
    %c0_i32 = arith.constant 0 : i32
    %22 = vector.broadcast %c0_i32 : i32 to vector<1x1x16xi32>
    %23 = arith.cmpi eq, %5, %22 : vector<1x1x16xi32>
    %24 = vector.extract_strided_slice %4 {offsets = [0, 0, 1], sizes = [3, 16, 1], strides = [1, 1, 1]} : vector<3x16x16xf32> to vector<3x16x1xf32>
    %25 = vector.shape_cast %23 : vector<1x1x16xi1> to vector<1x1x16xi1>
    %26 = vector.broadcast %25 : vector<1x1x16xi1> to vector<3x16x16xi1>
    %27 = vector.shape_cast %24 : vector<3x16x1xf32> to vector<3x16x1xf32>
    %28 = vector.broadcast %27 : vector<3x16x1xf32> to vector<3x16x16xf32>
    %29 = arith.select %26, %28, %21 : vector<3x16x16xi1>, vector<3x16x16xf32>
    %30 = arith.addf %18, %29 : vector<3x16x16xf32>
    %31 = vector.extract_strided_slice %4 {offsets = [0, 0, 2], sizes = [3, 16, 14], strides = [1, 1, 1]} : vector<3x16x16xf32> to vector<3x16x14xf32>
    %32 = vector.extract_strided_slice %4 {offsets = [0, 0, 0], sizes = [3, 16, 2], strides = [1, 1, 1]} : vector<3x16x16xf32> to vector<3x16x2xf32>
    %33 = tpu.concatenate %31, %32 in 2 : vector<3x16x14xf32>, vector<3x16x2xf32> -> vector<3x16x16xf32>
    %c15_i32_3 = arith.constant 15 : i32
    %34 = vector.broadcast %c15_i32_3 : i32 to vector<1x1x16xi32>
    %35 = arith.cmpi eq, %5, %34 : vector<1x1x16xi32>
    %36 = vector.extract_strided_slice %4 {offsets = [0, 0, 13], sizes = [3, 16, 1], strides = [1, 1, 1]} : vector<3x16x16xf32> to vector<3x16x1xf32>
    %37 = vector.shape_cast %35 : vector<1x1x16xi1> to vector<1x1x16xi1>
    %38 = vector.broadcast %37 : vector<1x1x16xi1> to vector<3x16x16xi1>
    %39 = vector.shape_cast %36 : vector<3x16x1xf32> to vector<3x16x1xf32>
    %40 = vector.broadcast %39 : vector<3x16x1xf32> to vector<3x16x16xf32>
    %41 = arith.select %38, %40, %33 : vector<3x16x16xi1>, vector<3x16x16xf32>
    %c14_i32 = arith.constant 14 : i32
    %42 = vector.broadcast %c14_i32 : i32 to vector<1x1x16xi32>
    %43 = arith.cmpi eq, %5, %42 : vector<1x1x16xi32>
    %44 = vector.extract_strided_slice %4 {offsets = [0, 0, 14], sizes = [3, 16, 1], strides = [1, 1, 1]} : vector<3x16x16xf32> to vector<3x16x1xf32>
    %45 = vector.shape_cast %43 : vector<1x1x16xi1> to vector<1x1x16xi1>
    %46 = vector.broadcast %45 : vector<1x1x16xi1> to vector<3x16x16xi1>
    %47 = vector.shape_cast %44 : vector<3x16x1xf32> to vector<3x16x1xf32>
    %48 = vector.broadcast %47 : vector<3x16x1xf32> to vector<3x16x16xf32>
    %49 = arith.select %46, %48, %41 : vector<3x16x16xi1>, vector<3x16x16xf32>
    %50 = arith.addf %30, %49 : vector<3x16x16xf32>
    %51 = vector.extract_strided_slice %4 {offsets = [0, 0, 14], sizes = [3, 16, 2], strides = [1, 1, 1]} : vector<3x16x16xf32> to vector<3x16x2xf32>
    %52 = vector.extract_strided_slice %4 {offsets = [0, 0, 0], sizes = [3, 16, 14], strides = [1, 1, 1]} : vector<3x16x16xf32> to vector<3x16x14xf32>
    %53 = tpu.concatenate %51, %52 in 2 : vector<3x16x2xf32>, vector<3x16x14xf32> -> vector<3x16x16xf32>
    %c0_i32_4 = arith.constant 0 : i32
    %54 = vector.broadcast %c0_i32_4 : i32 to vector<1x1x16xi32>
    %55 = arith.cmpi eq, %5, %54 : vector<1x1x16xi32>
    %56 = vector.extract_strided_slice %4 {offsets = [0, 0, 2], sizes = [3, 16, 1], strides = [1, 1, 1]} : vector<3x16x16xf32> to vector<3x16x1xf32>
    %57 = vector.shape_cast %55 : vector<1x1x16xi1> to vector<1x1x16xi1>
    %58 = vector.broadcast %57 : vector<1x1x16xi1> to vector<3x16x16xi1>
    %59 = vector.shape_cast %56 : vector<3x16x1xf32> to vector<3x16x1xf32>
    %60 = vector.broadcast %59 : vector<3x16x1xf32> to vector<3x16x16xf32>
    %61 = arith.select %58, %60, %53 : vector<3x16x16xi1>, vector<3x16x16xf32>
    %c1_i32 = arith.constant 1 : i32
    %62 = vector.broadcast %c1_i32 : i32 to vector<1x1x16xi32>
    %63 = arith.cmpi eq, %5, %62 : vector<1x1x16xi32>
    %64 = vector.extract_strided_slice %4 {offsets = [0, 0, 1], sizes = [3, 16, 1], strides = [1, 1, 1]} : vector<3x16x16xf32> to vector<3x16x1xf32>
    %65 = vector.shape_cast %63 : vector<1x1x16xi1> to vector<1x1x16xi1>
    %66 = vector.broadcast %65 : vector<1x1x16xi1> to vector<3x16x16xi1>
    %67 = vector.shape_cast %64 : vector<3x16x1xf32> to vector<3x16x1xf32>
    %68 = vector.broadcast %67 : vector<3x16x1xf32> to vector<3x16x16xf32>
    %69 = arith.select %66, %68, %61 : vector<3x16x16xi1>, vector<3x16x16xf32>
    %70 = arith.addf %50, %69 : vector<3x16x16xf32>
    %71 = vector.extract_strided_slice %70 {offsets = [0, 1, 0], sizes = [3, 15, 16], strides = [1, 1, 1]} : vector<3x16x16xf32> to vector<3x15x16xf32>
    %72 = vector.extract_strided_slice %70 {offsets = [0, 0, 0], sizes = [3, 1, 16], strides = [1, 1, 1]} : vector<3x16x16xf32> to vector<3x1x16xf32>
    %73 = tpu.concatenate %71, %72 in 1 : vector<3x15x16xf32>, vector<3x1x16xf32> -> vector<3x16x16xf32>
    %c15_i32_5 = arith.constant 15 : i32
    %74 = vector.broadcast %c15_i32_5 : i32 to vector<1x16x1xi32>
    %75 = arith.cmpi eq, %6, %74 : vector<1x16x1xi32>
    %76 = vector.extract_strided_slice %70 {offsets = [0, 14, 0], sizes = [3, 1, 16], strides = [1, 1, 1]} : vector<3x16x16xf32> to vector<3x1x16xf32>
    %77 = vector.shape_cast %75 : vector<1x16x1xi1> to vector<1x16x1xi1>
    %78 = vector.broadcast %77 : vector<1x16x1xi1> to vector<3x16x16xi1>
    %79 = vector.shape_cast %76 : vector<3x1x16xf32> to vector<3x1x16xf32>
    %80 = vector.broadcast %79 : vector<3x1x16xf32> to vector<3x16x16xf32>
    %81 = arith.select %78, %80, %73 : vector<3x16x16xi1>, vector<3x16x16xf32>
    %82 = arith.addf %70, %81 : vector<3x16x16xf32>
    %83 = vector.extract_strided_slice %70 {offsets = [0, 15, 0], sizes = [3, 1, 16], strides = [1, 1, 1]} : vector<3x16x16xf32> to vector<3x1x16xf32>
    %84 = vector.extract_strided_slice %70 {offsets = [0, 0, 0], sizes = [3, 15, 16], strides = [1, 1, 1]} : vector<3x16x16xf32> to vector<3x15x16xf32>
    %85 = tpu.concatenate %83, %84 in 1 : vector<3x1x16xf32>, vector<3x15x16xf32> -> vector<3x16x16xf32>
    %c0_i32_6 = arith.constant 0 : i32
    %86 = vector.broadcast %c0_i32_6 : i32 to vector<1x16x1xi32>
    %87 = arith.cmpi eq, %6, %86 : vector<1x16x1xi32>
    %88 = vector.extract_strided_slice %70 {offsets = [0, 1, 0], sizes = [3, 1, 16], strides = [1, 1, 1]} : vector<3x16x16xf32> to vector<3x1x16xf32>
    %89 = vector.shape_cast %87 : vector<1x16x1xi1> to vector<1x16x1xi1>
    %90 = vector.broadcast %89 : vector<1x16x1xi1> to vector<3x16x16xi1>
    %91 = vector.shape_cast %88 : vector<3x1x16xf32> to vector<3x1x16xf32>
    %92 = vector.broadcast %91 : vector<3x1x16xf32> to vector<3x16x16xf32>
    %93 = arith.select %90, %92, %85 : vector<3x16x16xi1>, vector<3x16x16xf32>
    %94 = arith.addf %82, %93 : vector<3x16x16xf32>
    %95 = vector.extract_strided_slice %70 {offsets = [0, 2, 0], sizes = [3, 14, 16], strides = [1, 1, 1]} : vector<3x16x16xf32> to vector<3x14x16xf32>
    %96 = vector.extract_strided_slice %70 {offsets = [0, 0, 0], sizes = [3, 2, 16], strides = [1, 1, 1]} : vector<3x16x16xf32> to vector<3x2x16xf32>
    %97 = tpu.concatenate %95, %96 in 1 : vector<3x14x16xf32>, vector<3x2x16xf32> -> vector<3x16x16xf32>
    %c15_i32_7 = arith.constant 15 : i32
    %98 = vector.broadcast %c15_i32_7 : i32 to vector<1x16x1xi32>
    %99 = arith.cmpi eq, %6, %98 : vector<1x16x1xi32>
    %100 = vector.extract_strided_slice %70 {offsets = [0, 13, 0], sizes = [3, 1, 16], strides = [1, 1, 1]} : vector<3x16x16xf32> to vector<3x1x16xf32>
    %101 = vector.shape_cast %99 : vector<1x16x1xi1> to vector<1x16x1xi1>
    %102 = vector.broadcast %101 : vector<1x16x1xi1> to vector<3x16x16xi1>
    %103 = vector.shape_cast %100 : vector<3x1x16xf32> to vector<3x1x16xf32>
    %104 = vector.broadcast %103 : vector<3x1x16xf32> to vector<3x16x16xf32>
    %105 = arith.select %102, %104, %97 : vector<3x16x16xi1>, vector<3x16x16xf32>
    %c14_i32_8 = arith.constant 14 : i32
    %106 = vector.broadcast %c14_i32_8 : i32 to vector<1x16x1xi32>
    %107 = arith.cmpi eq, %6, %106 : vector<1x16x1xi32>
    %108 = vector.extract_strided_slice %70 {offsets = [0, 14, 0], sizes = [3, 1, 16], strides = [1, 1, 1]} : vector<3x16x16xf32> to vector<3x1x16xf32>
    %109 = vector.shape_cast %107 : vector<1x16x1xi1> to vector<1x16x1xi1>
    %110 = vector.broadcast %109 : vector<1x16x1xi1> to vector<3x16x16xi1>
    %111 = vector.shape_cast %108 : vector<3x1x16xf32> to vector<3x1x16xf32>
    %112 = vector.broadcast %111 : vector<3x1x16xf32> to vector<3x16x16xf32>
    %113 = arith.select %110, %112, %105 : vector<3x16x16xi1>, vector<3x16x16xf32>
    %114 = arith.addf %94, %113 : vector<3x16x16xf32>
    %115 = vector.extract_strided_slice %70 {offsets = [0, 14, 0], sizes = [3, 2, 16], strides = [1, 1, 1]} : vector<3x16x16xf32> to vector<3x2x16xf32>
    %116 = vector.extract_strided_slice %70 {offsets = [0, 0, 0], sizes = [3, 14, 16], strides = [1, 1, 1]} : vector<3x16x16xf32> to vector<3x14x16xf32>
    %117 = tpu.concatenate %115, %116 in 1 : vector<3x2x16xf32>, vector<3x14x16xf32> -> vector<3x16x16xf32>
    %c0_i32_9 = arith.constant 0 : i32
    %118 = vector.broadcast %c0_i32_9 : i32 to vector<1x16x1xi32>
    %119 = arith.cmpi eq, %6, %118 : vector<1x16x1xi32>
    %120 = vector.extract_strided_slice %70 {offsets = [0, 2, 0], sizes = [3, 1, 16], strides = [1, 1, 1]} : vector<3x16x16xf32> to vector<3x1x16xf32>
    %121 = vector.shape_cast %119 : vector<1x16x1xi1> to vector<1x16x1xi1>
    %122 = vector.broadcast %121 : vector<1x16x1xi1> to vector<3x16x16xi1>
    %123 = vector.shape_cast %120 : vector<3x1x16xf32> to vector<3x1x16xf32>
    %124 = vector.broadcast %123 : vector<3x1x16xf32> to vector<3x16x16xf32>
    %125 = arith.select %122, %124, %117 : vector<3x16x16xi1>, vector<3x16x16xf32>
    %c1_i32_10 = arith.constant 1 : i32
    %126 = vector.broadcast %c1_i32_10 : i32 to vector<1x16x1xi32>
    %127 = arith.cmpi eq, %6, %126 : vector<1x16x1xi32>
    %128 = vector.extract_strided_slice %70 {offsets = [0, 1, 0], sizes = [3, 1, 16], strides = [1, 1, 1]} : vector<3x16x16xf32> to vector<3x1x16xf32>
    %129 = vector.shape_cast %127 : vector<1x16x1xi1> to vector<1x16x1xi1>
    %130 = vector.broadcast %129 : vector<1x16x1xi1> to vector<3x16x16xi1>
    %131 = vector.shape_cast %128 : vector<3x1x16xf32> to vector<3x1x16xf32>
    %132 = vector.broadcast %131 : vector<3x1x16xf32> to vector<3x16x16xf32>
    %133 = arith.select %130, %132, %125 : vector<3x16x16xi1>, vector<3x16x16xf32>
    %134 = arith.addf %114, %133 : vector<3x16x16xf32>
    %cst_11 = arith.constant 2.500000e+01 : f32
    %135 = vector.broadcast %cst_11 : f32 to vector<3x16x16xf32>
    %136 = arith.mulf %135, %4 : vector<3x16x16xf32>
    %137 = arith.subf %134, %136 : vector<3x16x16xf32>
    %cst_12 = arith.constant 0.020833334 : f32
    %138 = vector.broadcast %cst_12 : f32 to vector<3x16x16xf32>
    %139 = arith.mulf %137, %138 : vector<3x16x16xf32>
    %140 = vector.shape_cast %139 : vector<3x16x16xf32> to vector<1x3x16x16xf32>
    %cst_13 = arith.constant dense<0.000000e+00> : vector<1xf32>
    %141 = vector.multi_reduction <add>, %140, %cst_13 [1, 2, 3] : vector<1x3x16x16xf32> to vector<1xf32>
    %142 = vector.shape_cast %141 : vector<1xf32> to vector<1x1x1x1xf32>
    %143 = vector.extract %142[0, 0, 0, 0] : f32 from vector<1x1x1x1xf32>
    %144 = arith.mulf %139, %139 : vector<3x16x16xf32>
    %145 = vector.shape_cast %144 : vector<3x16x16xf32> to vector<1x3x16x16xf32>
    %cst_14 = arith.constant dense<0.000000e+00> : vector<1xf32>
    %146 = vector.multi_reduction <add>, %145, %cst_14 [1, 2, 3] : vector<1x3x16x16xf32> to vector<1xf32>
    %147 = vector.shape_cast %146 : vector<1xf32> to vector<1x1x1x1xf32>
    %148 = vector.extract %147[0, 0, 0, 0] : f32 from vector<1x1x1x1xf32>
    %149 = tpu.iota {dimensions = array<i32: 2>} : vector<1x1x2xi32>
    %c0_i32_15 = arith.constant 0 : i32
    %150 = vector.broadcast %c0_i32_15 : i32 to vector<1x1x2xi32>
    %151 = arith.cmpi eq, %149, %150 : vector<1x1x2xi32>
    %152 = vector.broadcast %143 : f32 to vector<1x1x2xf32>
    %153 = vector.broadcast %148 : f32 to vector<1x1x2xf32>
    %154 = arith.select %151, %152, %153 : vector<1x1x2xi1>, vector<1x1x2xf32>
    %c0_16 = arith.constant 0 : index
    %c0_17 = arith.constant 0 : index
    %c0_18 = arith.constant 0 : index
    %155 = vector.load %arg2[%c0_16, %c0_17, %c0_18] : memref<1x1x2xf32, #tpu.memory_space<vmem>>, vector<1x1x2xf32>
    tpu.vector_store %arg2[%c0_16, %c0_17, %c0_18], %154 {strides = array<i32>} : memref<1x1x2xf32, #tpu.memory_space<vmem>>, vector<1x1x2xf32>,
    return
  }
  func.func @transform_0(%arg0: i32) -> (i32, i32, i32) {
    %c0_i32 = arith.constant 0 : i32
    %c0_i32_0 = arith.constant 0 : i32
    %c0_i32_1 = arith.constant 0 : i32
    return %arg0, %c0_i32, %c0_i32_0 : i32, i32, i32
  }
  func.func @transform_1(%arg0: i32) -> (i32, i32, i32) {
    %c0_i32 = arith.constant 0 : i32
    %c0_i32_0 = arith.constant 0 : i32
    %c0_i32_1 = arith.constant 0 : i32
    return %arg0, %c0_i32, %c0_i32_0 : i32, i32, i32
  }
}

</mosaic_0001>

<llo_original>
// kernel: tpu_custom_call.1
$region0: #{tpu_custom_call.1}
  #allocation0 [shape = 'u32[]', space=smem, size = 0x4, offset = 0x4, fixed_abs, tag = 'smem constant byte address 0x4 - core index']
  #allocation1 [shape = 'u32[144,128]{1,0:T(1,128)}', space=vmem, size = 0x12000, scoped, tag = 'internal scratch']
  %s0 = inlined_call_operand.hbm [shape: f32[6,16,16], index: 0, kind: input, shape index: {}]
  %s1 = inlined_call_operand.hbm [shape: f32[2,1,2], index: 1, kind: output, shape index: {}]
  %s2 = sld [smem:[#allocation0]]
  $region41: #{tpu_custom_call.1} parent=0
    _
  %s4 = ssub.s32 1, %s2
  %s5 = scalar_select 0, %s4, %s2
  $region1: #{tpu_custom_call.1} parent=0
    #allocation2 [shape = 'u8[49152]{0}', space=vmem, size = 0xc000, scoped, tag = 'input window, operand 0']
    #allocation3 [shape = 's32[2]{0}', space=sflag, size = 0x8, scoped, tag = 'scoped memory for tpu_custom_call.1']
    #allocation4 [shape = 's32[2]{0}', space=sflag, size = 0x8, scoped, tag = 'scoped memory for tpu_custom_call.1']
    #allocation5 [shape = 'u8[1024]{0}', space=vmem, size = 0x400, scoped, tag = 'output window, operand 0']
    %6 = vsyncpa [#allocation3], 0
    %s7 = scalar_lea.sflag [#allocation3], 1
    %8 = vsyncpa %s7, 0
    %9 = vsyncpa [#allocation4], 0
    %s10 = scalar_lea.sflag [#allocation4], 1
    %11 = vsyncpa %s10, 0
    loop: start=0, step=1, limit=4
    $region2: #{tpu_custom_call.1} parent=1 // loop_pre_header
      _
    $region3: #{tpu_custom_call.1} parent=1 // loop_header
      %s13 = sphi 0, %s17
      %p14 = scmp.ge.s32.totalorder %s13, 4
      %s23 = sphi 0, %s25
      %s26 = sphi 0, %s23
      %s27 = sphi 0, %s26
      %s43 = sphi 0, %s27
      %s49 = sphi 0, %s51
      %s52 = sphi 0, %s49
      %s53 = sphi 0, %s52
      %s69 = sphi 0, %s53
    $region4: #{tpu_custom_call.1} parent=1 // loop_header_branch
      %16 = sbr.rel (%p14) target = $region8
    $region5: #{tpu_custom_call.1} parent=1 // loop_body
      %s18 = ssub.s32 %s13, 1
      %s19 = ssub.s32 %s13, 2
      %s20 = sadd.s32 %s13, 1
      %s21 = ssub.s32 %s13, %s20
      %p22 = scmp.eq.s32.totalorder %s21, 0
      %s24 = sadd.s32 %s23, 1
      %s25 = scalar_select %p22, %s23, %s24
      %p28 = pneg %p22
      %p29 = scmp.eq.s32.totalorder %s13, 1
      %p30 = por %p28, %p29
      %p31 = scmp.ne.s32.totalorder %s23, %s26
      %p32 = scmp.eq.s32.totalorder %s13, 0
      %p33 = por %p31, %p32
      %p34 = scmp.ne.s32.totalorder %s23, %s26
      %p35 = scmp.eq.s32.totalorder %s18, 1
      %p36 = por %p34, %p35
      %p37 = scmp.ne.s32.totalorder %s26, %s27
      %p38 = scmp.eq.s32.totalorder %s18, 0
      %p39 = por %p37, %p38
      %p40 = scmp.ne.s32.totalorder %s26, %s27
      %p41 = scmp.eq.s32.totalorder %s19, 1
      %p42 = por %p40, %p41
      %p44 = scmp.ne.s32.totalorder %s27, %s43
      %p45 = scmp.eq.s32.totalorder %s19, 0
      %p46 = por %p44, %p45
      %s47 = ssub.s32 %s13, %s20
      %p48 = scmp.eq.s32.totalorder %s47, 0
      %s50 = sadd.s32 %s49, 1
      %s51 = scalar_select %p48, %s49, %s50
      %p54 = pneg %p48
      %p55 = scmp.eq.s32.totalorder %s13, 1
      %p56 = por %p54, %p55
      %p57 = scmp.ne.s32.totalorder %s49, %s52
      %p58 = scmp.eq.s32.totalorder %s13, 0
      %p59 = por %p57, %p58
      %p60 = scmp.ne.s32.totalorder %s49, %s52
      %p61 = scmp.eq.s32.totalorder %s18, 1
      %p62 = por %p60, %p61
      %p63 = scmp.ne.s32.totalorder %s52, %s53
      %p64 = scmp.eq.s32.totalorder %s18, 0
      %p65 = por %p63, %p64
      %p66 = scmp.ne.s32.totalorder %s52, %s53
      %p67 = scmp.eq.s32.totalorder %s19, 1
      %p68 = por %p66, %p67
      %p70 = scmp.ne.s32.totalorder %s53, %s69
      %p71 = scmp.eq.s32.totalorder %s19, 0
      %p72 = por %p70, %p71
      %p73 = scmp.le.s32.totalorder 1, %s13
      %p74 = scmp.lt.s32.totalorder %s13, 3
      %p75 = pnand %p73, %p74
      %p76 = pneg %p75
      // Predicated region
      $region9: #{tpu_custom_call.1} parent=5 // pred_check
        _
      $region10: #{tpu_custom_call.1} parent=5 // pred_check_branch
        %78 = sbr.rel (%p75) target = $region12
      $region11: #{tpu_custom_call.1} parent=5 // pred_region
        %s79 = ssub.s32 %s13, 1
      $region12: #{tpu_custom_call.1} parent=5 // pred_fallthru
        _
      %p80 = scmp.lt.s32.totalorder %s13, 2
      // Predicated region
      $region13: #{tpu_custom_call.1} parent=5 // pred_check
        %p81 = pneg %p80
      $region14: #{tpu_custom_call.1} parent=5 // pred_check_branch
        %83 = sbr.rel (%p81) target = $region16
      $region15: #{tpu_custom_call.1} parent=5 // pred_region
        // Predicated region
        $region17: #{tpu_custom_call.1} parent=15 // pred_check
          %p84 = pneg %p33
        $region18: #{tpu_custom_call.1} parent=15 // pred_check_branch
          %86 = sbr.rel (%p84) target = $region20
        $region19: #{tpu_custom_call.1} parent=15 // pred_region
          %s87 = sand.u32 %s23, 1
          %s88 = scalar_lea.sflag [#allocation3], %s87
          %s89 = sand.u32 %s23, 1
          %s90 = smul.addr %s89, 48
          %s91 = scalar_lea.vmem [#allocation2], %s90
          %s92 = smul.u32 3, %s13
          %s94 = ssub.s32 768, 768
          %95 = vsyncadd %s88, %s94
          %s96 = smul.addr %s92, 2
          %s97 = smul.addr %s96, 128
          %s98 = scalar_lea.hbm %s0, %s97
          %s99 = sshll.u32 %s91, 4
          %s100 = int_to_ptr.vmem [resolvable:$true] %s99
          %105 = dma.hbm_to_vmem [thread:$0]  %s98, 768, %s100, %s88, 128, 128, 8
        $region20: #{tpu_custom_call.1} parent=15 // pred_fallthru
          _
      $region16: #{tpu_custom_call.1} parent=5 // pred_fallthru
        _
      %p106 = scmp.le.s32.totalorder 1, %s13
      %p107 = scmp.lt.s32.totalorder %s13, 3
      %p108 = pnand %p106, %p107
      %p109 = pneg %p108
      // Predicated region
      $region21: #{tpu_custom_call.1} parent=5 // pred_check
        _
      $region22: #{tpu_custom_call.1} parent=5 // pred_check_branch
        %111 = sbr.rel (%p108) target = $region24
      $region23: #{tpu_custom_call.1} parent=5 // pred_region
        %s112 = ssub.s32 %s13, 1
        %s113 = sand.u32 %s26, 1
        %s114 = scalar_lea.sflag [#allocation3], %s113
        %s115 = sand.u32 %s26, 1
        %s116 = smul.addr %s115, 48
        %s117 = scalar_lea.vmem [#allocation2], %s116
        // Predicated region
        $region25: #{tpu_custom_call.1} parent=23 // pred_check
          %p118 = pneg %p39
        $region26: #{tpu_custom_call.1} parent=23 // pred_check_branch
          %120 = sbr.rel (%p118) target = $region28
        $region27: #{tpu_custom_call.1} parent=23 // pred_region
          %121 = dma.done %s114, 768
        $region28: #{tpu_custom_call.1} parent=23 // pred_fallthru
          _
        %s122 = sand.u32 %s26, 1
        %s123 = scalar_lea.sflag [#allocation3], %s122
        %s124 = sand.u32 %s26, 1
        %s125 = smul.addr %s124, 48
        %s126 = scalar_lea.vmem [#allocation2], %s125
        %p127 = pneg %p39
        %p128 = pneg %p36
        %p129 = pneg %p65
        %p130 = pneg %p62
        %s131 = sand.u32 %s52, 1
        %s132 = scalar_lea.sflag [#allocation4], %s131
        %s133 = sand.u32 %s52, 1
        %s134 = scalar_lea.vmem [#allocation5], %s133
        %s135 = smul.u32 3, %s18
        %v136 = vld [vmem:[%s117] sm:$0xff]
        %v137 = vld [vmem:[%s117 + $0x8] sm:$0xff]
        %v138 = vld [vmem:[%s117 + $0x10] sm:$0xff]
        %v139 = vld [vmem:[%s117 + $0x18] sm:$0xff]
        %v140 = vld [vmem:[%s117 + $0x20] sm:$0xff]
        %v141 = vld [vmem:[%s117 + $0x28] sm:$0xff]
        %v142 = vadd.f32 %v136, 1.0
        %v143 = vadd.f32 %v137, 1.0
        %v144 = vadd.f32 %v138, 1.0
        %v145 = vadd.f32 %v139, 1.0
        %v146 = vadd.f32 %v140, 1.0
        %v147 = vadd.f32 %v141, 1.0
        %v148 = vmul.f32 %v142, 0.5
        %v149 = vmul.f32 %v143, 0.5
        %v150 = vmul.f32 %v144, 0.5
        %v151 = vmul.f32 %v145, 0.5
        %v152 = vmul.f32 %v146, 0.5
        %v153 = vmul.f32 %v147, 0.5
        %v154 = vlaneseq
        %v155 = vand.u32 %v154, 127
        %v156 = vlaneseq
        %v157 = vshrl.u32 %v156, 7
        %v158 = vadd.s32 %v157, 8
        %165 = vrot.lane.b32.xlu0 %v148, 127
        %v166 = vpop.permute.xlu0 %165
        %167 = vrot.lane.b32.xlu0 %v149, 127
        %v168 = vpop.permute.xlu0 %167
        %169 = vrot.lane.b32.xlu0 %v150, 127
        %v170 = vpop.permute.xlu0 %169
        %171 = vrot.lane.b32.xlu0 %v151, 127
        %v172 = vpop.permute.xlu0 %171
        %173 = vrot.lane.b32.xlu0 %v152, 127
        %v174 = vpop.permute.xlu0 %173
        %175 = vrot.lane.b32.xlu0 %v153, 127
        %v176 = vpop.permute.xlu0 %175
        %183 = vrot.lane.b32.xlu0 %v148, 15
        %v184 = vpop.permute.xlu0 %183
        %185 = vrot.lane.b32.xlu0 %v149, 15
        %v186 = vpop.permute.xlu0 %185
        %187 = vrot.lane.b32.xlu0 %v150, 15
        %v188 = vpop.permute.xlu0 %187
        %189 = vrot.lane.b32.xlu0 %v151, 15
        %v190 = vpop.permute.xlu0 %189
        %191 = vrot.lane.b32.xlu0 %v152, 15
        %v192 = vpop.permute.xlu0 %191
        %193 = vrot.lane.b32.xlu0 %v153, 15
        %v194 = vpop.permute.xlu0 %193
        %vm201 = vcmask 121856
        %v202 = vsel %vm201, %v166, %v184
        %v203 = vsel %vm201, %v168, %v186
        %v204 = vsel %vm201, %v170, %v188
        %v205 = vsel %vm201, %v172, %v190
        %v206 = vsel %vm201, %v174, %v192
        %v207 = vsel %vm201, %v176, %v194
        %vm208 = vcmp.eq.s32.totalorder %v155, 15
        %v209 = vsel %vm208, 1, 0
        %vm210 = vcmp.eq.s32.totalorder %v209, 1
        %211 = vset.pattern.permute.xlu0 14
        %212 = vperm.xlu0 %211, %v148
        %v213 = vpop.permute.xlu0 %212
        %215 = vset.pattern.permute.xlu0 14
        %216 = vperm.xlu0 %215, %v149
        %v217 = vpop.permute.xlu0 %216
        %219 = vset.pattern.permute.xlu0 14
        %220 = vperm.xlu0 %219, %v150
        %v221 = vpop.permute.xlu0 %220
        %223 = vset.pattern.permute.xlu0 14
        %224 = vperm.xlu0 %223, %v151
        %v225 = vpop.permute.xlu0 %224
        %227 = vset.pattern.permute.xlu0 14
        %228 = vperm.xlu0 %227, %v152
        %v229 = vpop.permute.xlu0 %228
        %231 = vset.pattern.permute.xlu0 14
        %232 = vperm.xlu0 %231, %v153
        %v233 = vpop.permute.xlu0 %232
        %v235 = vsel %vm210, %v213, %v202
        %v236 = vsel %vm210, %v217, %v203
        %v237 = vsel %vm210, %v221, %v204
        %v238 = vsel %vm210, %v225, %v205
        %v239 = vsel %vm210, %v229, %v206
        %v240 = vsel %vm210, %v233, %v207
        %v241 = vadd.f32 %v148, %v235
        %v242 = vadd.f32 %v149, %v236
        %v243 = vadd.f32 %v150, %v237
        %v244 = vadd.f32 %v151, %v238
        %v245 = vadd.f32 %v152, %v239
        %v246 = vadd.f32 %v153, %v240
        %247 = vrot.lane.b32.xlu0 %v148, 113
        %v248 = vpop.permute.xlu0 %247
        %249 = vrot.lane.b32.xlu0 %v149, 113
        %v250 = vpop.permute.xlu0 %249
        %251 = vrot.lane.b32.xlu0 %v150, 113
        %v252 = vpop.permute.xlu0 %251
        %253 = vrot.lane.b32.xlu0 %v151, 113
        %v254 = vpop.permute.xlu0 %253
        %255 = vrot.lane.b32.xlu0 %v152, 113
        %v256 = vpop.permute.xlu0 %255
        %257 = vrot.lane.b32.xlu0 %v153, 113
        %v258 = vpop.permute.xlu0 %257
        %265 = vrot.lane.b32.xlu0 %v148, 1
        %v266 = vpop.permute.xlu0 %265
        %267 = vrot.lane.b32.xlu0 %v149, 1
        %v268 = vpop.permute.xlu0 %267
        %269 = vrot.lane.b32.xlu0 %v150, 1
        %v270 = vpop.permute.xlu0 %269
        %271 = vrot.lane.b32.xlu0 %v151, 1
        %v272 = vpop.permute.xlu0 %271
        %273 = vrot.lane.b32.xlu0 %v152, 1
        %v274 = vpop.permute.xlu0 %273
        %275 = vrot.lane.b32.xlu0 %v153, 1
        %v276 = vpop.permute.xlu0 %275
        %vm283 = vcmask 7168
        %v284 = vsel %vm283, %v248, %v266
        %v285 = vsel %vm283, %v250, %v268
        %v286 = vsel %vm283, %v252, %v270
        %v287 = vsel %vm283, %v254, %v272
        %v288 = vsel %vm283, %v256, %v274
        %v289 = vsel %vm283, %v258, %v276
        %vm290 = vcmp.eq.s32.totalorder %v155, 0
        %v291 = vsel %vm290, 1, 0
        %vm292 = vcmp.eq.s32.totalorder %v291, 1
        %293 = vset.pattern.permute.xlu0 1
        %294 = vperm.xlu0 %293, %v148
        %v295 = vpop.permute.xlu0 %294
        %297 = vset.pattern.permute.xlu0 1
        %298 = vperm.xlu0 %297, %v149
        %v299 = vpop.permute.xlu0 %298
        %301 = vset.pattern.permute.xlu0 1
        %302 = vperm.xlu0 %301, %v150
        %v303 = vpop.permute.xlu0 %302
        %305 = vset.pattern.permute.xlu0 1
        %306 = vperm.xlu0 %305, %v151
        %v307 = vpop.permute.xlu0 %306
        %309 = vset.pattern.permute.xlu0 1
        %310 = vperm.xlu0 %309, %v152
        %v311 = vpop.permute.xlu0 %310
        %313 = vset.pattern.permute.xlu0 1
        %314 = vperm.xlu0 %313, %v153
        %v315 = vpop.permute.xlu0 %314
        %v317 = vsel %vm292, %v295, %v284
        %v318 = vsel %vm292, %v299, %v285
        %v319 = vsel %vm292, %v303, %v286
        %v320 = vsel %vm292, %v307, %v287
        %v321 = vsel %vm292, %v311, %v288
        %v322 = vsel %vm292, %v315, %v289
        %v323 = vadd.f32 %v241, %v317
        %v324 = vadd.f32 %v242, %v318
        %v325 = vadd.f32 %v243, %v319
        %v326 = vadd.f32 %v244, %v320
        %v327 = vadd.f32 %v245, %v321
        %v328 = vadd.f32 %v246, %v322
        %329 = vrot.lane.b32.xlu0 %v148, 126
        %v330 = vpop.permute.xlu0 %329
        %331 = vrot.lane.b32.xlu0 %v149, 126
        %v332 = vpop.permute.xlu0 %331
        %333 = vrot.lane.b32.xlu0 %v150, 126
        %v334 = vpop.permute.xlu0 %333
        %335 = vrot.lane.b32.xlu0 %v151, 126
        %v336 = vpop.permute.xlu0 %335
        %337 = vrot.lane.b32.xlu0 %v152, 126
        %v338 = vpop.permute.xlu0 %337
        %339 = vrot.lane.b32.xlu0 %v153, 126
        %v340 = vpop.permute.xlu0 %339
        %347 = vrot.lane.b32.xlu0 %v148, 14
        %v348 = vpop.permute.xlu0 %347
        %349 = vrot.lane.b32.xlu0 %v149, 14
        %v350 = vpop.permute.xlu0 %349
        %351 = vrot.lane.b32.xlu0 %v150, 14
        %v352 = vpop.permute.xlu0 %351
        %353 = vrot.lane.b32.xlu0 %v151, 14
        %v354 = vpop.permute.xlu0 %353
        %355 = vrot.lane.b32.xlu0 %v152, 14
        %v356 = vpop.permute.xlu0 %355
        %357 = vrot.lane.b32.xlu0 %v153, 14
        %v358 = vpop.permute.xlu0 %357
        %vm365 = vcmask 113664
        %v366 = vsel %vm365, %v330, %v348
        %v367 = vsel %vm365, %v332, %v350
        %v368 = vsel %vm365, %v334, %v352
        %v369 = vsel %vm365, %v336, %v354
        %v370 = vsel %vm365, %v338, %v356
        %v371 = vsel %vm365, %v340, %v358
        %372 = vset.pattern.permute.xlu0 13
        %373 = vperm.xlu0 %372, %v148
        %v374 = vpop.permute.xlu0 %373
        %376 = vset.pattern.permute.xlu0 13
        %377 = vperm.xlu0 %376, %v149
        %v378 = vpop.permute.xlu0 %377
        %380 = vset.pattern.permute.xlu0 13
        %381 = vperm.xlu0 %380, %v150
        %v382 = vpop.permute.xlu0 %381
        %384 = vset.pattern.permute.xlu0 13
        %385 = vperm.xlu0 %384, %v151
        %v386 = vpop.permute.xlu0 %385
        %388 = vset.pattern.permute.xlu0 13
        %389 = vperm.xlu0 %388, %v152
        %v390 = vpop.permute.xlu0 %389
        %392 = vset.pattern.permute.xlu0 13
        %393 = vperm.xlu0 %392, %v153
        %v394 = vpop.permute.xlu0 %393
        %v396 = vsel %vm210, %v374, %v366
        %v397 = vsel %vm210, %v378, %v367
        %v398 = vsel %vm210, %v382, %v368
        %v399 = vsel %vm210, %v386, %v369
        %v400 = vsel %vm210, %v390, %v370
        %v401 = vsel %vm210, %v394, %v371
        %vm402 = vcmp.eq.s32.totalorder %v155, 14
        %v403 = vsel %vm402, 1, 0
        %vm404 = vcmp.eq.s32.totalorder %v403, 1
        %v405 = vsel %vm404, %v213, %v396
        %v406 = vsel %vm404, %v217, %v397
        %v407 = vsel %vm404, %v221, %v398
        %v408 = vsel %vm404, %v225, %v399
        %v409 = vsel %vm404, %v229, %v400
        %v410 = vsel %vm404, %v233, %v401
        %v411 = vadd.f32 %v323, %v405
        %v412 = vadd.f32 %v324, %v406
        %v413 = vadd.f32 %v325, %v407
        %v414 = vadd.f32 %v326, %v408
        %v415 = vadd.f32 %v327, %v409
        %v416 = vadd.f32 %v328, %v410
        %417 = vrot.lane.b32.xlu0 %v148, 114
        %v418 = vpop.permute.xlu0 %417
        %419 = vrot.lane.b32.xlu0 %v149, 114
        %v420 = vpop.permute.xlu0 %419
        %421 = vrot.lane.b32.xlu0 %v150, 114
        %v422 = vpop.permute.xlu0 %421
        %423 = vrot.lane.b32.xlu0 %v151, 114
        %v424 = vpop.permute.xlu0 %423
        %425 = vrot.lane.b32.xlu0 %v152, 114
        %v426 = vpop.permute.xlu0 %425
        %427 = vrot.lane.b32.xlu0 %v153, 114
        %v428 = vpop.permute.xlu0 %427
        %435 = vrot.lane.b32.xlu0 %v148, 2
        %v436 = vpop.permute.xlu0 %435
        %437 = vrot.lane.b32.xlu0 %v149, 2
        %v438 = vpop.permute.xlu0 %437
        %439 = vrot.lane.b32.xlu0 %v150, 2
        %v440 = vpop.permute.xlu0 %439
        %441 = vrot.lane.b32.xlu0 %v151, 2
        %v442 = vpop.permute.xlu0 %441
        %443 = vrot.lane.b32.xlu0 %v152, 2
        %v444 = vpop.permute.xlu0 %443
        %445 = vrot.lane.b32.xlu0 %v153, 2
        %v446 = vpop.permute.xlu0 %445
        %vm453 = vcmask 15360
        %v454 = vsel %vm453, %v418, %v436
        %v455 = vsel %vm453, %v420, %v438
        %v456 = vsel %vm453, %v422, %v440
        %v457 = vsel %vm453, %v424, %v442
        %v458 = vsel %vm453, %v426, %v444
        %v459 = vsel %vm453, %v428, %v446
        %460 = vset.pattern.permute.xlu0 2
        %461 = vperm.xlu0 %460, %v148
        %v462 = vpop.permute.xlu0 %461
        %464 = vset.pattern.permute.xlu0 2
        %465 = vperm.xlu0 %464, %v149
        %v466 = vpop.permute.xlu0 %465
        %468 = vset.pattern.permute.xlu0 2
        %469 = vperm.xlu0 %468, %v150
        %v470 = vpop.permute.xlu0 %469
        %472 = vset.pattern.permute.xlu0 2
        %473 = vperm.xlu0 %472, %v151
        %v474 = vpop.permute.xlu0 %473
        %476 = vset.pattern.permute.xlu0 2
        %477 = vperm.xlu0 %476, %v152
        %v478 = vpop.permute.xlu0 %477
        %480 = vset.pattern.permute.xlu0 2
        %481 = vperm.xlu0 %480, %v153
        %v482 = vpop.permute.xlu0 %481
        %v484 = vsel %vm292, %v462, %v454
        %v485 = vsel %vm292, %v466, %v455
        %v486 = vsel %vm292, %v470, %v456
        %v487 = vsel %vm292, %v474, %v457
        %v488 = vsel %vm292, %v478, %v458
        %v489 = vsel %vm292, %v482, %v459
        %vm490 = vcmp.eq.s32.totalorder %v155, 1
        %v491 = vsel %vm490, 1, 0
        %vm492 = vcmp.eq.s32.totalorder %v491, 1
        %v493 = vsel %vm492, %v295, %v484
        %v494 = vsel %vm492, %v299, %v485
        %v495 = vsel %vm492, %v303, %v486
        %v496 = vsel %vm492, %v307, %v487
        %v497 = vsel %vm492, %v311, %v488
        %v498 = vsel %vm492, %v315, %v489
        %v499 = vadd.f32 %v411, %v493
        %v500 = vadd.f32 %v412, %v494
        %v501 = vadd.f32 %v413, %v495
        %v502 = vadd.f32 %v414, %v496
        %v503 = vadd.f32 %v415, %v497
        %v504 = vadd.f32 %v416, %v498
        %vm511 = vcmask 1046528
        %v512 = vrot.slane %v499, 1
        %v513 = vrot.slane %v500, 1
        %v514 = vsel %vm511, %v512, %v513
        %v515 = vrot.slane %v501, 1
        %v516 = vrot.slane %v502, 1
        %v517 = vsel %vm511, %v515, %v516
        %v518 = vrot.slane %v503, 1
        %v519 = vrot.slane %v504, 1
        %v520 = vsel %vm511, %v518, %v519
        %v530 = vsel %vm511, %v513, %v512
        %v531 = vsel %vm511, %v516, %v515
        %v532 = vsel %vm511, %v519, %v518
        %vm533 = vcmp.eq.s32.totalorder %v157, 15
        %vm534 = vcmp.eq.s32.totalorder %v158, 15
        %v535 = vsel %vm533, 1, 0
        %v536 = vsel %vm534, 1, 0
        %vm537 = vcmp.eq.s32.totalorder %v535, 1
        %vm538 = vcmp.eq.s32.totalorder %v536, 1
        %v539 = vlaneseq
        %v540 = vshrl.u32 %v539, 7
        %v541 = vsub.s32 6, %v540
        %v542 = vrot.slane %v500, %v541
        %v543 = vlaneseq
        %v544 = vshrl.u32 %v543, 7
        %v545 = vsub.s32 6, %v544
        %v546 = vrot.slane %v502, %v545
        %v547 = vlaneseq
        %v548 = vshrl.u32 %v547, 7
        %v549 = vsub.s32 6, %v548
        %v550 = vrot.slane %v504, %v549
        %v551 = vsel %vm537, %v542, %v514
        %v552 = vsel %vm538, %v542, %v530
        %v553 = vsel %vm537, %v546, %v517
        %v554 = vsel %vm538, %v546, %v531
        %v555 = vsel %vm537, %v550, %v520
        %v556 = vsel %vm538, %v550, %v532
        %v557 = vadd.f32 %v499, %v551
        %v558 = vadd.f32 %v500, %v552
        %v559 = vadd.f32 %v501, %v553
        %v560 = vadd.f32 %v502, %v554
        %v561 = vadd.f32 %v503, %v555
        %v562 = vadd.f32 %v504, %v556
        %v563 = vrot.slane %v500, 7
        %v564 = vrot.slane %v502, 7
        %v565 = vrot.slane %v504, 7
        %vm569 = vcmask 1040384
        %v570 = vrot.slane %v499, 7
        %v571 = vsel %vm569, %v570, %v563
        %v572 = vrot.slane %v501, 7
        %v573 = vsel %vm569, %v572, %v564
        %v574 = vrot.slane %v503, 7
        %v575 = vsel %vm569, %v574, %v565
        %v582 = vsel %vm569, %v563, %v570
        %v583 = vsel %vm569, %v564, %v572
        %v584 = vsel %vm569, %v565, %v574
        %vm585 = vcmp.eq.s32.totalorder %v157, 0
        %vm586 = vcmp.eq.s32.totalorder %v158, 0
        %v587 = vsel %vm585, 1, 0
        %v588 = vsel %vm586, 1, 0
        %vm589 = vcmp.eq.s32.totalorder %v587, 1
        %vm590 = vcmp.eq.s32.totalorder %v588, 1
        %v591 = vlaneseq
        %v592 = vshrl.u32 %v591, 7
        %v593 = vsub.s32 1, %v592
        %v594 = vrot.slane %v499, %v593
        %v595 = vlaneseq
        %v596 = vshrl.u32 %v595, 7
        %v597 = vsub.s32 1, %v596
        %v598 = vrot.slane %v501, %v597
        %v599 = vlaneseq
        %v600 = vshrl.u32 %v599, 7
        %v601 = vsub.s32 1, %v600
        %v602 = vrot.slane %v503, %v601
        %v603 = vsel %vm589, %v594, %v582
        %v604 = vsel %vm590, %v594, %v571
        %v605 = vsel %vm589, %v598, %v583
        %v606 = vsel %vm590, %v598, %v573
        %v607 = vsel %vm589, %v602, %v584
        %v608 = vsel %vm590, %v602, %v575
        %v609 = vadd.f32 %v557, %v603
        %v610 = vadd.f32 %v558, %v604
        %v611 = vadd.f32 %v559, %v605
        %v612 = vadd.f32 %v560, %v606
        %v613 = vadd.f32 %v561, %v607
        %v614 = vadd.f32 %v562, %v608
        %vm615 = vcmask 1045504
        %v616 = vrot.slane %v499, 2
        %v617 = vrot.slane %v500, 2
        %v618 = vsel %vm615, %v616, %v617
        %v619 = vrot.slane %v501, 2
        %v620 = vrot.slane %v502, 2
        %v621 = vsel %vm615, %v619, %v620
        %v622 = vrot.slane %v503, 2
        %v623 = vrot.slane %v504, 2
        %v624 = vsel %vm615, %v622, %v623
        %v634 = vsel %vm615, %v617, %v616
        %v635 = vsel %vm615, %v620, %v619
        %v636 = vsel %vm615, %v623, %v622
        %v637 = vlaneseq
        %v638 = vshrl.u32 %v637, 7
        %v639 = vsub.s32 5, %v638
        %v640 = vrot.slane %v500, %v639
        %v641 = vlaneseq
        %v642 = vshrl.u32 %v641, 7
        %v643 = vsub.s32 5, %v642
        %v644 = vrot.slane %v502, %v643
        %v645 = vlaneseq
        %v646 = vshrl.u32 %v645, 7
        %v647 = vsub.s32 5, %v646
        %v648 = vrot.slane %v504, %v647
        %v649 = vsel %vm537, %v640, %v618
        %v650 = vsel %vm538, %v640, %v634
        %v651 = vsel %vm537, %v644, %v621
        %v652 = vsel %vm538, %v644, %v635
        %v653 = vsel %vm537, %v648, %v624
        %v654 = vsel %vm538, %v648, %v636
        %vm655 = vcmp.eq.s32.totalorder %v157, 14
        %vm656 = vcmp.eq.s32.totalorder %v158, 14
        %v657 = vsel %vm655, 1, 0
        %v658 = vsel %vm656, 1, 0
        %vm659 = vcmp.eq.s32.totalorder %v657, 1
        %vm660 = vcmp.eq.s32.totalorder %v658, 1
        %v661 = vsel %vm659, %v542, %v649
        %v662 = vsel %vm660, %v542, %v650
        %v663 = vsel %vm659, %v546, %v651
        %v664 = vsel %vm660, %v546, %v652
        %v665 = vsel %vm659, %v550, %v653
        %v666 = vsel %vm660, %v550, %v654
        %v667 = vadd.f32 %v609, %v661
        %v668 = vadd.f32 %v610, %v662
        %v669 = vadd.f32 %v611, %v663
        %v670 = vadd.f32 %v612, %v664
        %v671 = vadd.f32 %v613, %v665
        %v672 = vadd.f32 %v614, %v666
        %v673 = vrot.slane %v500, 6
        %v674 = vrot.slane %v502, 6
        %v675 = vrot.slane %v504, 6
        %vm679 = vcmask 1041408
        %v680 = vrot.slane %v499, 6
        %v681 = vsel %vm679, %v680, %v673
        %v682 = vrot.slane %v501, 6
        %v683 = vsel %vm679, %v682, %v674
        %v684 = vrot.slane %v503, 6
        %v685 = vsel %vm679, %v684, %v675
        %v692 = vsel %vm679, %v673, %v680
        %v693 = vsel %vm679, %v674, %v682
        %v694 = vsel %vm679, %v675, %v684
        %v695 = vlaneseq
        %v696 = vshrl.u32 %v695, 7
        %v697 = vsub.s32 2, %v696
        %v698 = vrot.slane %v499, %v697
        %v699 = vlaneseq
        %v700 = vshrl.u32 %v699, 7
        %v701 = vsub.s32 2, %v700
        %v702 = vrot.slane %v501, %v701
        %v703 = vlaneseq
        %v704 = vshrl.u32 %v703, 7
        %v705 = vsub.s32 2, %v704
        %v706 = vrot.slane %v503, %v705
        %v707 = vsel %vm589, %v698, %v692
        %v708 = vsel %vm590, %v698, %v681
        %v709 = vsel %vm589, %v702, %v693
        %v710 = vsel %vm590, %v702, %v683
        %v711 = vsel %vm589, %v706, %v694
        %v712 = vsel %vm590, %v706, %v685
        %vm713 = vcmp.eq.s32.totalorder %v157, 1
        %vm714 = vcmp.eq.s32.totalorder %v158, 1
        %v715 = vsel %vm713, 1, 0
        %v716 = vsel %vm714, 1, 0
        %vm717 = vcmp.eq.s32.totalorder %v715, 1
        %vm718 = vcmp.eq.s32.totalorder %v716, 1
        %v719 = vsel %vm717, %v594, %v707
        %v720 = vsel %vm718, %v594, %v708
        %v721 = vsel %vm717, %v598, %v709
        %v722 = vsel %vm718, %v598, %v710
        %v723 = vsel %vm717, %v602, %v711
        %v724 = vsel %vm718, %v602, %v712
        %v725 = vadd.f32 %v667, %v719
        %v726 = vadd.f32 %v668, %v720
        %v727 = vadd.f32 %v669, %v721
        %v728 = vadd.f32 %v670, %v722
        %v729 = vadd.f32 %v671, %v723
        %v730 = vadd.f32 %v672, %v724
        %v731 = vmul.f32 %v148, 25.0
        %v732 = vmul.f32 %v149, 25.0
        %v733 = vmul.f32 %v150, 25.0
        %v734 = vmul.f32 %v151, 25.0
        %v735 = vmul.f32 %v152, 25.0
        %v736 = vmul.f32 %v153, 25.0
        %v737 = vsub.f32 %v725, %v731
        %v738 = vsub.f32 %v726, %v732
        %v739 = vsub.f32 %v727, %v733
        %v740 = vsub.f32 %v728, %v734
        %v741 = vsub.f32 %v729, %v735
        %v742 = vsub.f32 %v730, %v736
        %v743 = vmul.f32 %v737, 0.020833334
        %v744 = vmul.f32 %v738, 0.020833334
        %v745 = vmul.f32 %v739, 0.020833334
        %v746 = vmul.f32 %v740, 0.020833334
        %v747 = vmul.f32 %v741, 0.020833334
        %v748 = vmul.f32 %v742, 0.020833334
        %vm749 = vcmask 130048
        %v750 = vsel %vm749, %v743, 0.0
        %v751 = vsel %vm749, %v744, 0.0
        %v752 = vadd.f32 %v750, %v751
        %v753 = vsel %vm749, %v745, 0.0
        %v754 = vadd.f32 %v752, %v753
        %v755 = vsel %vm749, %v746, 0.0
        %v756 = vadd.f32 %v754, %v755
        %v757 = vsel %vm749, %v747, 0.0
        %v758 = vadd.f32 %v756, %v757
        %v759 = vsel %vm749, %v748, 0.0
        %v760 = vadd.f32 %v758, %v759
        %761 = vadd.xlane.f32.xlu0 %v760
        %v762 = vpop.xlane.xlu0 %761
        %v763 = vrot.slane %v762, 4
        %v764 = vadd.f32 %v762, %v763
        %v765 = vrot.slane %v764, 2
        %v766 = vadd.f32 %v764, %v765
        %v767 = vrot.slane %v766, 1
        %v768 = vadd.f32 %v766, %v767
        %s769 = vtos %v768
        %v770 = vmul.f32 %v743, %v743
        %v771 = vmul.f32 %v744, %v744
        %v772 = vmul.f32 %v745, %v745
        %v773 = vmul.f32 %v746, %v746
        %v774 = vmul.f32 %v747, %v747
        %v775 = vmul.f32 %v748, %v748
        %v776 = vsel %vm749, %v770, 0.0
        %v777 = vsel %vm749, %v771, 0.0
        %v778 = vadd.f32 %v776, %v777
        %v779 = vsel %vm749, %v772, 0.0
        %v780 = vadd.f32 %v778, %v779
        %v781 = vsel %vm749, %v773, 0.0
        %v782 = vadd.f32 %v780, %v781
        %v783 = vsel %vm749, %v774, 0.0
        %v784 = vadd.f32 %v782, %v783
        %v785 = vsel %vm749, %v775, 0.0
        %v786 = vadd.f32 %v784, %v785
        %787 = vadd.xlane.f32.xlu0 %v786
        %v788 = vpop.xlane.xlu0 %787
        %v789 = vrot.slane %v788, 4
        %v790 = vadd.f32 %v788, %v789
        %v791 = vrot.slane %v790, 2
        %v792 = vadd.f32 %v790, %v791
        %v793 = vrot.slane %v792, 1
        %v794 = vadd.f32 %v792, %v793
        %s795 = vtos %v794
        %v796 = vstv %s769
        %v797 = vstv %s795
        %v798 = vsel %vm290, %v796, %v797
        %vm799 = vcmask 8192
        %800 = vst.msk [vmem:[%s134] sm:$0x1] %vm799, %v798
        %s801 = sand.u32 %s52, 1
        %s802 = scalar_lea.sflag [#allocation4], %s801
        %s803 = sand.u32 %s52, 1
        %s804 = scalar_lea.vmem [#allocation5], %s803
        // Predicated region
        $region29: #{tpu_custom_call.1} parent=23 // pred_check
          %p805 = pneg %p62
        $region30: #{tpu_custom_call.1} parent=23 // pred_check_branch
          %807 = sbr.rel (%p805) target = $region32
        $region31: #{tpu_custom_call.1} parent=23 // pred_region
          %s809 = ssub.s32 16, 16
          %810 = vsyncadd %s802, %s809
          %s811 = smul.addr %s18, 16
          %s812 = scalar_lea.hbm %s1, %s811
          %s814 = sshll.u32 %s804, 4
          %s815 = int_to_ptr.vmem [resolvable:$true] %s814
          %817 = dma.vmem_to_hbm [thread:$0]  %s815, 16, %s812, %s802
        $region32: #{tpu_custom_call.1} parent=23 // pred_fallthru
          _
      $region24: #{tpu_custom_call.1} parent=5 // pred_fallthru
        _
      %p818 = scmp.le.s32.totalorder 2, %s13
      // Predicated region
      $region33: #{tpu_custom_call.1} parent=5 // pred_check
        %p819 = pneg %p818
      $region34: #{tpu_custom_call.1} parent=5 // pred_check_branch
        %821 = sbr.rel (%p819) target = $region36
      $region35: #{tpu_custom_call.1} parent=5 // pred_region
        %s822 = ssub.s32 %s13, 2
        // Predicated region
        $region37: #{tpu_custom_call.1} parent=35 // pred_check
          %p823 = pneg %p68
        $region38: #{tpu_custom_call.1} parent=35 // pred_check_branch
          %825 = sbr.rel (%p823) target = $region40
        $region39: #{tpu_custom_call.1} parent=35 // pred_region
          %s826 = sand.u32 %s53, 1
          %s827 = scalar_lea.sflag [#allocation4], %s826
          %s828 = sand.u32 %s53, 1
          %s829 = scalar_lea.vmem [#allocation5], %s828
          %830 = dma.done %s827, 16
        $region40: #{tpu_custom_call.1} parent=35 // pred_fallthru
          _
      $region36: #{tpu_custom_call.1} parent=5 // pred_fallthru
        _
    $region6: #{tpu_custom_call.1} parent=1 // loop_footer
      %s17 = sadd.s32 1, %s13
    $region7: #{tpu_custom_call.1} parent=1 // loop_footer_branch
      %12 = sbr.rel target = $region3
    $region8: #{tpu_custom_call.1} parent=1 // loop_exit
      _
    %831 = vsyncpa [#allocation3], 1
    %s832 = scalar_lea.sflag [#allocation3], 1
    %833 = vsyncpa %s832, 1
    %834 = vsyncpa [#allocation4], 1
    %s835 = scalar_lea.sflag [#allocation4], 1
    %836 = vsyncpa %s835, 1

</llo_original>
